<compile_context>
chip_gen: v5e
topology: v5e:2x2
jax: 0.10.0
libtpu: 0.0.40
codegen_flags: <defaults>
</compile_context>

<pallas_src>
import functools

import jax
import jax.numpy as jnp
from jax.experimental import pallas as pl
from jax.experimental.pallas import tpu as pltpu

HIDDEN = 64
LANE = 128          # padded feature width for hidden / action dims
_BIAS_ROWS = 8      # each bias segment is padded to one sublane group


def _round_up(x, m):
    return (x + m - 1) // m * m


def _cdiv(a, b):
    return -(-a // b)


# ------------------------------------------------------------------ kernel ---

def _qnet_kernel(x_ref, p_ref, *out_refs, s_rows, n_actions,
                 emit_q, emit_actions, emit_qmax):
    """Fused 3-layer MLP forward (+ optional argmax / max_a Q) for one tile.

    x_ref    : (TB, s_rows)      activations (f32, zero-padded state dim)
    p_ref    : (s_rows+280, 128) packed params [w1|b1|w2|b2|w3|b3], f32 or bf16
    out_refs : subset of
        q_ref    (TB, 128) f32   q-values, columns >= n_actions are exact 0
        a_ref    (TB, 1)   i32   argmax action indices
        qmax_ref (TB, 1)   f32   max_a q (DQN target term)
    """
    # static row offsets into the packed parameter buffer
    o_b1 = s_rows
    o_w2 = o_b1 + _BIAS_ROWS
    o_b2 = o_w2 + LANE
    o_w3 = o_b2 + _BIAS_ROWS
    o_b3 = o_w3 + LANE

    cdt = p_ref.dtype  # MXU input dtype (f32 or bf16); accumulation is f32

    x = x_ref[...].astype(cdt)
    w1 = p_ref[0:s_rows, :]
    b1 = p_ref[o_b1:o_b1 + 1, :].astype(jnp.float32)
    w2 = p_ref[o_w2:o_w2 + LANE, :]
    b2 = p_ref[o_b2:o_b2 + 1, :].astype(jnp.float32)
    w3 = p_ref[o_w3:o_w3 + LANE, :]
    b3 = p_ref[o_b3:o_b3 + 1, :].astype(jnp.float32)

    h1 = jnp.maximum(jnp.dot(x, w1, preferred_element_type=jnp.float32) + b1, 0.0)
    h2 = jnp.maximum(
        jnp.dot(h1.astype(cdt), w2, preferred_element_type=jnp.float32) + b2, 0.0)
    q = jnp.dot(h2.astype(cdt), w3, preferred_element_type=jnp.float32) + b3

    i = 0
    if emit_q:
        out_refs[i][...] = q          # lane-dense (TB, 128) store
        i += 1

    if emit_actions or emit_qmax:
        col = jax.lax.broadcasted_iota(jnp.int32, q.shape, 1)
        qm = jnp.where(col < n_actions, q, -jnp.inf)
        qmax = jnp.max(qm, axis=1, keepdims=True)
        if emit_actions:
            # first-max tie-breaking, matching jnp/torch argmax
            idx = jnp.where(qm >= qmax, col, jnp.int32(LANE))
            out_refs[i][...] = jnp.min(idx, axis=1, keepdims=True).astype(jnp.int32)
            i += 1
        if emit_qmax:
            out_refs[i][...] = qmax


# --------------------------------------------------------------- dispatcher ---

def qnetwork_apply(s, params, *, batch_tile=2048,
                   return_q=True, return_actions=False, return_max_q=False):
    """Runs the fused kernel, emitting only the requested outputs.

    Returns a dict with keys among {"q", "actions", "max_q"}:
        q       (B, n_actions) f32
        actions (B,)           int32
        max_q   (B,)           f32
    """
    assert return_q or return_actions or return_max_q
    packed = params["packed"]
    state_dim = params["state_dim"]
    n_actions = params["n_actions"]
    s_rows = params["s_rows"]
    total_rows = packed.shape[0]

    B, s_in = s.shape
    assert s_in == state_dim

    # ---- batch tiling -------------------------------------------------------
    # Enough tiles to respect batch_tile; for B > 8 force >= 2 grid steps so
    # the "parallel" batch axis is actually shardable across v7x's 2 TCs
    # (harmless ~0.35us extra step on v5e/v6e).
    n_tiles = max(1, _cdiv(B, max(batch_tile, 8)))
    if B > 8:
        n_tiles = max(n_tiles, 2)
    tb = _round_up(_cdiv(B, n_tiles), 8)
    b_pad = _round_up(B, tb)
    grid = b_pad // tb

    if b_pad != B or s_rows != s_in:
        s = jnp.pad(s, ((0, b_pad - B), (0, s_rows - s_in)))

    # ---- outputs ------------------------------------------------------------
    out_shape = []
    out_specs = []
    if return_q:
        out_shape.append(jax.ShapeDtypeStruct((b_pad, LANE), jnp.float32))
        out_specs.append(pl.BlockSpec((tb, LANE), lambda i: (i, 0)))
    if return_actions:
        out_shape.append(jax.ShapeDtypeStruct((b_pad, 1), jnp.int32))
        out_specs.append(pl.BlockSpec((tb, 1), lambda i: (i, 0)))
    if return_max_q:
        out_shape.append(jax.ShapeDtypeStruct((b_pad, 1), jnp.float32))
        out_specs.append(pl.BlockSpec((tb, 1), lambda i: (i, 0)))

    kernel = functools.partial(
        _qnet_kernel, s_rows=s_rows, n_actions=n_actions,
        emit_q=return_q, emit_actions=return_actions, emit_qmax=return_max_q)

    # ---- VMEM budget --------------------------------------------------------
    # Every (tb, <=128) block occupies a full 128-lane row in VMEM; inputs and
    # outputs are double-buffered; allow room for the f32 h1/h2/q intermediates.
    # Capped at 64 MiB so the request never exceeds v7x physical VMEM; always
    # at least 32 MiB so enlarged tiles also fit v5e's 16 MiB scoped default.
    blk_bytes = tb * LANE * 4
    vmem_est = 2 * (1 + len(out_shape)) * blk_bytes
    vmem_est += 2 * total_rows * LANE * packed.dtype.itemsize
    vmem_est += 4 * blk_bytes
    vmem_limit = int(min(max(2 * vmem_est, 32 << 20), 64 << 20))

    outs = pl.pallas_call(
        kernel,
        out_shape=tuple(out_shape),
        grid_spec=pltpu.PrefetchScalarGridSpec(
            num_scalar_prefetch=0,
            grid=(grid,),
            in_specs=[
                pl.BlockSpec((tb, s_rows), lambda i: (i, 0)),
                # constant block index -> packed weights stay VMEM-resident
                pl.BlockSpec((total_rows, LANE), lambda i: (0, 0)),
            ],
            out_specs=out_specs,
        ),
        compiler_params=pltpu.CompilerParams(
            dimension_semantics=("parallel",),
            vmem_limit_bytes=vmem_limit,
        ),
    )(s, packed)

    result = {}
    i = 0
    if return_q:
        result["q"] = outs[i][:B, :n_actions]; i += 1
    if return_actions:
        result["actions"] = outs[i][:B, 0]; i += 1
    if return_max_q:
        result["max_q"] = outs[i][:B, 0]; i += 1
    return result


def qnetwork_forward(s, params, *, batch_tile=2048):
    """Q-network forward pass: (B, state_dim) f32 -> (B, n_actions) f32."""
    return qnetwork_apply(s, params, batch_tile=batch_tile, return_q=True)["q"]


def qnetwork_predict(s, params, *, batch_tile=2048):
    """Argmax action selection (QNetwork.predict): (B,) int32.

    Predict-only path: the (tb,128) f32 q slab is never written to HBM.
    """
    return qnetwork_apply(s, params, batch_tile=batch_tile,
                          return_q=False, return_actions=True)["actions"]


def qnetwork_forward_and_predict(s, params, *, batch_tile=2048):
    r = qnetwork_apply(s, params, batch_tile=batch_tile,
                       return_q=True, return_actions=True)
    return r["q"], r["actions"]


def qnetwork_max_q(s, params, *, batch_tile=2048):
    """max_a Q(s, a) (DQN target term) without writing the full q slab."""
    return qnetwork_apply(s, params, batch_tile=batch_tile,
                          return_q=False, return_max_q=True)["max_q"]


# ------------------------------------------------------------------- params ---

def init_raw_params(key, state_dim, n_actions):
    """PyTorch-default-style init; weights stored (in_features, out_features)."""
    ks = jax.random.split(key, 6)

    def lin(kw, kb, fan_in, fan_out):
        bound = 1.0 / jnp.sqrt(jnp.float32(fan_in))
        w = jax.random.uniform(kw, (fan_in, fan_out), jnp.float32, -bound, bound)
        b = jax.random.uniform(kb, (1, fan_out), jnp.float32, -bound, bound)
        return w, b

    w1, b1 = lin(ks[0], ks[1], state_dim, HIDDEN)
    w2, b2 = lin(ks[2], ks[3], HIDDEN, HIDDEN)
    w3, b3 = lin(ks[4], ks[5], HIDDEN, n_actions)
    return {"w1": w1, "b1": b1, "w2": w2, "b2": b2, "w3": w3, "b3": b3}


def pack_params(raw, state_dim, n_actions, dtype=jnp.bfloat16):
    """Pack w1,b1,w2,b2,w3,b3 into one zero-padded (s_rows+280, 128) buffer.

    Default dtype is bf16 (halves parameter DMA; MXU-native on v5e/v6e/v7x) —
    the kernel still accumulates in f32.  Pass dtype=jnp.float32 for exact
    f32 forward numerics.
    """
    assert n_actions <= LANE, f"n_actions={n_actions} must be <= {LANE}"
    assert HIDDEN <= LANE, f"HIDDEN={HIDDEN} must be <= {LANE}"
    assert state_dim >= 1

    s_rows = _round_up(max(state_dim, 8), 8)

    def pad(a, rows):
        r, c = a.shape
        return jnp.pad(a, ((0, rows - r), (0, LANE - c)))

    buf = jnp.concatenate(
        [
            pad(raw["w1"], s_rows),
            pad(raw["b1"], _BIAS_ROWS),
            pad(raw["w2"], LANE),
            pad(raw["b2"], _BIAS_ROWS),
            pad(raw["w3"], LANE),
            pad(raw["b3"], _BIAS_ROWS),
        ],
        axis=0,
    ).astype(dtype)

    return {
        "packed": buf,
        "state_dim": state_dim,
        "n_actions": n_actions,
        "s_rows": s_rows,
    }


def init_params(key, state_dim, n_actions, dtype=jnp.bfloat16):
    return pack_params(init_raw_params(key, state_dim, n_actions),
                       state_dim, n_actions, dtype=dtype)


# --------------------------------------------------------------------- main ---

if __name__ == "__main__":
    key = jax.random.PRNGKey(0)
    k_params, k_x, k_x2 = jax.random.split(key, 3)

    B, STATE_DIM, N_ACTIONS = 8, 16, 8
    raw = init_raw_params(k_params, STATE_DIM, N_ACTIONS)
    params_f32 = pack_params(raw, STATE_DIM, N_ACTIONS, dtype=jnp.float32)
    params_bf16 = pack_params(raw, STATE_DIM, N_ACTIONS)  # bf16 default

    s = jax.random.normal(k_x, (B, STATE_DIM), jnp.float32)

    # pure-JAX reference
    def ref_fwd(x):
        h1 = jnp.maximum(x @ raw["w1"] + raw["b1"], 0.0)
        h2 = jnp.maximum(h1 @ raw["w2"] + raw["b2"], 0.0)
        return h2 @ raw["w3"] + raw["b3"]

    q_ref = ref_fwd(s)
    a_ref_np = jnp.argmax(q_ref, axis=1).astype(jnp.int32)

    # 1) forward + fused argmax (f32 params, tight tolerance)
    q, a = jax.block_until_ready(qnetwork_forward_and_predict(s, params_f32))
    assert q.shape == (B, N_ACTIONS) and q.dtype == jnp.float32
    assert jnp.allclose(q, q_ref, atol=1e-5, rtol=1e-5)
    assert a.shape == (B,) and a.dtype == jnp.int32
    assert jnp.array_equal(a, a_ref_np)

    # 2) predict-only path (no q writeback at all)
    a_only = jax.block_until_ready(qnetwork_predict(s, params_f32))
    assert jnp.array_equal(a_only, a_ref_np)

    # 3) forward-only path (no argmax epilogue)
    q_only = jax.block_until_ready(qnetwork_forward(s, params_f32))
    assert jnp.allclose(q_only, q_ref, atol=1e-5, rtol=1e-5)

    # 4) larger ragged batch -> grid >= 2 (v7x dual-TC path), all outputs,
    #    including the fused max_a Q used by the DQN target.
    B2 = 300
    s2 = jax.random.normal(k_x2, (B2, STATE_DIM), jnp.float32)
    r2 = jax.block_until_ready(
        qnetwork_apply(s2, params_f32, batch_tile=128,
                       return_q=True, return_actions=True, return_max_q=True))
    q2_ref = ref_fwd(s2)
    assert r2["q"].shape == (B2, N_ACTIONS)
    assert jnp.allclose(r2["q"], q2_ref, atol=1e-5, rtol=1e-5)
    assert jnp.array_equal(r2["actions"],
                           jnp.argmax(q2_ref, axis=1).astype(jnp.int32))
    assert jnp.allclose(r2["max_q"], jnp.max(q2_ref, axis=1),
                        atol=1e-5, rtol=1e-5)

    # 5) default bf16 parameter storage, f32 accumulation (relaxed tolerance)
    q16, _ = jax.block_until_ready(qnetwork_forward_and_predict(s, params_bf16))
    assert q16.shape == (B, N_ACTIONS)
    assert jnp.allclose(q16, q_ref, atol=5e-2, rtol=5e-2)

    print("KERNEL_OK")
</pallas_src>

<mosaic_0001>
module attributes {stable_mosaic.version = 11 : i64} {
  func.func @_qnet_kernel(%arg0: i32, %arg1: memref<8x16xf32, #tpu.memory_space<vmem>>, %arg2: memref<296x128xf32, #tpu.memory_space<vmem>>, %arg3: memref<8x128xf32, #tpu.memory_space<vmem>>, %arg4: memref<8x1xi32, #tpu.memory_space<vmem>>) attributes {dimension_semantics = [#tpu.dimension_semantics<parallel>], iteration_bounds = array<i64: 1>, scalar_prefetch = 0 : i64, scratch_operands = 0 : i64, tpu.core_type = #tpu.core_type<tc>, window_params = [{transform_indices = @transform_0, window_bounds = array<i64: 8, 16>}, {pipeline_mode = #tpu.pipeline_mode<synchronous>, transform_indices = @transform_1, window_bounds = array<i64: 296, 128>}, {transform_indices = @transform_2, window_bounds = array<i64: 8, 128>}, {transform_indices = @transform_3, window_bounds = array<i64: 8, 1>}]} {
    %c0 = arith.constant 0 : index
    %c0_0 = arith.constant 0 : index
    %0 = vector.load %arg1[%c0, %c0_0] : memref<8x16xf32, #tpu.memory_space<vmem>>, vector<8x16xf32>
    %c0_1 = arith.constant 0 : index
    %c0_2 = arith.constant 0 : index
    %1 = vector.load %arg2[%c0_1, %c0_2] : memref<296x128xf32, #tpu.memory_space<vmem>>, vector<16x128xf32>
    %c16 = arith.constant 16 : index
    %c0_3 = arith.constant 0 : index
    %2 = vector.load %arg2[%c16, %c0_3] : memref<296x128xf32, #tpu.memory_space<vmem>>, vector<1x128xf32>
    %c24 = arith.constant 24 : index
    %c0_4 = arith.constant 0 : index
    %3 = vector.load %arg2[%c24, %c0_4] : memref<296x128xf32, #tpu.memory_space<vmem>>, vector<128x128xf32>
    %c152 = arith.constant 152 : index
    %c0_5 = arith.constant 0 : index
    %4 = vector.load %arg2[%c152, %c0_5] : memref<296x128xf32, #tpu.memory_space<vmem>>, vector<1x128xf32>
    %c160 = arith.constant 160 : index
    %c0_6 = arith.constant 0 : index
    %5 = vector.load %arg2[%c160, %c0_6] : memref<296x128xf32, #tpu.memory_space<vmem>>, vector<128x128xf32>
    %c288 = arith.constant 288 : index
    %c0_7 = arith.constant 0 : index
    %6 = vector.load %arg2[%c288, %c0_7] : memref<296x128xf32, #tpu.memory_space<vmem>>, vector<1x128xf32>
    %cst = arith.constant dense<0.000000e+00> : vector<8x128xf32>
    %7 = tpu.matmul %0, %1, %cst {dimension_numbers = #tpu.dot_dimension_numbers<[1], [0], [0], [1], [0, 0, 1, 1], [], []>} : vector<8x16xf32>, vector<16x128xf32>, vector<8x128xf32> -> vector<8x128xf32>
    %8 = vector.broadcast %2 : vector<1x128xf32> to vector<8x128xf32>
    %9 = arith.addf %7, %8 : vector<8x128xf32>
    %cst_8 = arith.constant 0.000000e+00 : f32
    %10 = vector.broadcast %cst_8 : f32 to vector<8x128xf32>
    %11 = arith.maximumf %9, %10 : vector<8x128xf32>
    %cst_9 = arith.constant dense<0.000000e+00> : vector<8x128xf32>
    %12 = tpu.matmul %11, %3, %cst_9 {dimension_numbers = #tpu.dot_dimension_numbers<[1], [0], [0], [1], [0, 0, 1, 1], [], []>} : vector<8x128xf32>, vector<128x128xf32>, vector<8x128xf32> -> vector<8x128xf32>
    %13 = vector.broadcast %4 : vector<1x128xf32> to vector<8x128xf32>
    %14 = arith.addf %12, %13 : vector<8x128xf32>
    %cst_10 = arith.constant 0.000000e+00 : f32
    %15 = vector.broadcast %cst_10 : f32 to vector<8x128xf32>
    %16 = arith.maximumf %14, %15 : vector<8x128xf32>
    %cst_11 = arith.constant dense<0.000000e+00> : vector<8x128xf32>
    %17 = tpu.matmul %16, %5, %cst_11 {dimension_numbers = #tpu.dot_dimension_numbers<[1], [0], [0], [1], [0, 0, 1, 1], [], []>} : vector<8x128xf32>, vector<128x128xf32>, vector<8x128xf32> -> vector<8x128xf32>
    %18 = vector.broadcast %6 : vector<1x128xf32> to vector<8x128xf32>
    %19 = arith.addf %17, %18 : vector<8x128xf32>
    %c0_12 = arith.constant 0 : index
    %c0_13 = arith.constant 0 : index
    %20 = vector.load %arg3[%c0_12, %c0_13] : memref<8x128xf32, #tpu.memory_space<vmem>>, vector<8x128xf32>
    tpu.vector_store %arg3[%c0_12, %c0_13], %19 {strides = array<i32>} : memref<8x128xf32, #tpu.memory_space<vmem>>, vector<8x128xf32>,
    %21 = tpu.iota {dimensions = array<i32: 1>} : vector<8x128xi32>
    %c8_i32 = arith.constant 8 : i32
    %22 = vector.broadcast %c8_i32 : i32 to vector<8x128xi32>
    %23 = arith.cmpi slt, %21, %22 : vector<8x128xi32>
    %cst_14 = arith.constant 0xFF800000 : f32
    %24 = vector.broadcast %cst_14 : f32 to vector<8x128xf32>
    %25 = arith.select %23, %19, %24 : vector<8x128xi1>, vector<8x128xf32>
    %cst_15 = arith.constant dense<0xFF800000> : vector<8xf32>
    %26 = vector.multi_reduction <maximumf>, %25, %cst_15 [1] : vector<8x128xf32> to vector<8xf32>
    %27 = vector.shape_cast %26 : vector<8xf32> to vector<8x1xf32>
    %28 = vector.broadcast %27 : vector<8x1xf32> to vector<8x128xf32>
    %29 = arith.cmpf oge, %25, %28 : vector<8x128xf32>
    %c128_i32 = arith.constant 128 : i32
    %30 = vector.broadcast %c128_i32 : i32 to vector<8x128xi32>
    %31 = arith.select %29, %21, %30 : vector<8x128xi1>, vector<8x128xi32>
    %cst_16 = arith.constant dense<2147483647> : vector<8xi32>
    %32 = vector.multi_reduction <minsi>, %31, %cst_16 [1] : vector<8x128xi32> to vector<8xi32>
    %33 = vector.shape_cast %32 : vector<8xi32> to vector<8x1xi32>
    %c0_17 = arith.constant 0 : index
    %c0_18 = arith.constant 0 : index
    %34 = vector.load %arg4[%c0_17, %c0_18] : memref<8x1xi32, #tpu.memory_space<vmem>>, vector<8x1xi32>
    tpu.vector_store %arg4[%c0_17, %c0_18], %33 {strides = array<i32>} : memref<8x1xi32, #tpu.memory_space<vmem>>, vector<8x1xi32>,
    return
  }
  func.func @transform_0(%arg0: i32) -> (i32, i32) {
    %c0_i32 = arith.constant 0 : i32
    %c0_i32_0 = arith.constant 0 : i32
    return %arg0, %c0_i32 : i32, i32
  }
  func.func @transform_1(%arg0: i32) -> (i32, i32) {
    %c0_i32 = arith.constant 0 : i32
    %c0_i32_0 = arith.constant 0 : i32
    %c0_i32_1 = arith.constant 0 : i32
    return %c0_i32, %c0_i32_0 : i32, i32
  }
  func.func @transform_2(%arg0: i32) -> (i32, i32) {
    %c0_i32 = arith.constant 0 : i32
    %c0_i32_0 = arith.constant 0 : i32
    return %arg0, %c0_i32 : i32, i32
  }
  func.func @transform_3(%arg0: i32) -> (i32, i32) {
    %c0_i32 = arith.constant 0 : i32
    %c0_i32_0 = arith.constant 0 : i32
    return %arg0, %c0_i32 : i32, i32
  }
}

</mosaic_0001>

<llo_original>
// kernel: tpu_custom_call.1
$region0: #{tpu_custom_call.1}
  #allocation0 [shape = 'u32[]', space=smem, size = 0x4, offset = 0x4, fixed_abs, tag = 'smem constant byte address 0x4 - core index']
  #allocation1 [shape = 'u32[72,128]{1,0:T(1,128)}', space=vmem, size = 0x9000, scoped, tag = 'internal scratch']
  %s0 = inlined_call_operand.hbm [shape: f32[8,16], index: 0, kind: input, shape index: {}]
  %s1 = inlined_call_operand.hbm [shape: f32[296,128], index: 1, kind: input, shape index: {}]
  %s2 = inlined_call_operand.hbm [shape: f32[8,128], index: 2, kind: output, shape index: {0}]
  %s3 = inlined_call_operand.vmem [shape: s32[8,1], index: 3, kind: output, shape index: {1}]
  %4 = xla_tuple %s2, %s3
  %s5 = sld [smem:[#allocation0]]
  $region34: #{tpu_custom_call.1} parent=0
    _
  %s7 = ssub.s32 1, %s5
  %s8 = scalar_select 0, %s7, %s5
  $region1: #{tpu_custom_call.1} parent=0
    #allocation2 [shape = 'u8[4096]{0}', space=vmem, size = 0x1000, scoped, tag = 'input window, operand 0, single buffered']
    #allocation3 [shape = 's32[1]{0}', space=sflag, size = 0x4, scoped, tag = 'scoped memory for tpu_custom_call.1']
    #allocation4 [shape = 's32[1]{0}', space=sflag, size = 0x4, scoped, tag = 'scoped memory for tpu_custom_call.1']
    #allocation5 [shape = 'u8[151552]{0}', space=vmem, size = 0x25000, scoped, tag = 'input window, operand 1, single buffered']
    #allocation6 [shape = 's32[1]{0}', space=sflag, size = 0x4, scoped, tag = 'scoped memory for tpu_custom_call.1']
    #allocation7 [shape = 'u8[4096]{0}', space=vmem, size = 0x1000, scoped, tag = 'output window, operand 0, single buffered']
    %9 = vsyncpa [#allocation3], 0
    %10 = vsyncpa [#allocation6], 0
    %11 = vsyncpa [#allocation4], 0
    // Predicated region
    $region2: #{tpu_custom_call.1} parent=1 // pred_check
      _
    $region3: #{tpu_custom_call.1} parent=1 // pred_check_branch
      %13 = sbr.rel (0) target = $region5
    $region4: #{tpu_custom_call.1} parent=1 // pred_region
      %15 = vsyncadd [#allocation3], 0
      %s17 = sshll.u32 %s0, 4
      %s18 = int_to_ptr.hbm [resolvable:$true] %s17
      %s19 = sshll.u32 [#allocation2], 4
      %s20 = int_to_ptr.vmem [resolvable:$true] %s19
      %22 = dma.hbm_to_vmem [thread:$0]  %s18, 128, %s20, [#allocation3]
    $region5: #{tpu_custom_call.1} parent=1 // pred_fallthru
      _
    // Predicated region
    $region6: #{tpu_custom_call.1} parent=1 // pred_check
      _
    $region7: #{tpu_custom_call.1} parent=1 // pred_check_branch
      %24 = sbr.rel (0) target = $region9
    $region8: #{tpu_custom_call.1} parent=1 // pred_region
      %26 = vsyncadd [#allocation6], 0
      %s27 = sshll.u32 %s1, 4
      %s28 = int_to_ptr.hbm [resolvable:$true] %s27
      %s29 = sshll.u32 [#allocation5], 4
      %s30 = int_to_ptr.vmem [resolvable:$true] %s29
      %35 = dma.hbm_to_vmem [thread:$0]  %s28, 4736, %s30, [#allocation6], 128, 128, 8
    $region9: #{tpu_custom_call.1} parent=1 // pred_fallthru
      _
    // Predicated region
    $region10: #{tpu_custom_call.1} parent=1 // pred_check
      _
    $region11: #{tpu_custom_call.1} parent=1 // pred_check_branch
      %37 = sbr.rel (0) target = $region13
    $region12: #{tpu_custom_call.1} parent=1 // pred_region
      %39 = dma.done [#allocation3], 128
    $region13: #{tpu_custom_call.1} parent=1 // pred_fallthru
      _
    // Predicated region
    $region14: #{tpu_custom_call.1} parent=1 // pred_check
      _
    $region15: #{tpu_custom_call.1} parent=1 // pred_check_branch
      %41 = sbr.rel (0) target = $region17
    $region16: #{tpu_custom_call.1} parent=1 // pred_region
      %43 = dma.done [#allocation6], 4736
    $region17: #{tpu_custom_call.1} parent=1 // pred_fallthru
      _
    %v44 = vld [vmem:[#allocation2] sm:$0xff]
    %v45 = vld [vmem:[#allocation5] sm:$0xff]
    %v46 = vld [vmem:[#allocation5 + $0x8] sm:$0xff]
    %v47 = vld [vmem:[#allocation5 + $0x10] sm:$0x1]
    %v48 = vld [vmem:[#allocation5 + $0x18] sm:$0xff]
    %v49 = vld [vmem:[#allocation5 + $0x20] sm:$0xff]
    %v50 = vld [vmem:[#allocation5 + $0x28] sm:$0xff]
    %v51 = vld [vmem:[#allocation5 + $0x30] sm:$0xff]
    %v52 = vld [vmem:[#allocation5 + $0x38] sm:$0xff]
    %v53 = vld [vmem:[#allocation5 + $0x40] sm:$0xff]
    %v54 = vld [vmem:[#allocation5 + $0x48] sm:$0xff]
    %v55 = vld [vmem:[#allocation5 + $0x50] sm:$0xff]
    %v56 = vld [vmem:[#allocation5 + $0x58] sm:$0xff]
    %v57 = vld [vmem:[#allocation5 + $0x60] sm:$0xff]
    %v58 = vld [vmem:[#allocation5 + $0x68] sm:$0xff]
    %v59 = vld [vmem:[#allocation5 + $0x70] sm:$0xff]
    %v60 = vld [vmem:[#allocation5 + $0x78] sm:$0xff]
    %v61 = vld [vmem:[#allocation5 + $0x80] sm:$0xff]
    %v62 = vld [vmem:[#allocation5 + $0x88] sm:$0xff]
    %v63 = vld [vmem:[#allocation5 + $0x90] sm:$0xff]
    %v64 = vld [vmem:[#allocation5 + $0x98] sm:$0x1]
    %v65 = vld [vmem:[#allocation5 + $0xa0] sm:$0xff]
    %v66 = vld [vmem:[#allocation5 + $0xa8] sm:$0xff]
    %v67 = vld [vmem:[#allocation5 + $0xb0] sm:$0xff]
    %v68 = vld [vmem:[#allocation5 + $0xb8] sm:$0xff]
    %v69 = vld [vmem:[#allocation5 + $0xc0] sm:$0xff]
    %v70 = vld [vmem:[#allocation5 + $0xc8] sm:$0xff]
    %v71 = vld [vmem:[#allocation5 + $0xd0] sm:$0xff]
    %v72 = vld [vmem:[#allocation5 + $0xd8] sm:$0xff]
    %v73 = vld [vmem:[#allocation5 + $0xe0] sm:$0xff]
    %v74 = vld [vmem:[#allocation5 + $0xe8] sm:$0xff]
    %v75 = vld [vmem:[#allocation5 + $0xf0] sm:$0xff]
    %v76 = vld [vmem:[#allocation5 + $0xf8] sm:$0xff]
    %v77 = vld [vmem:[#allocation5 + $0x100] sm:$0xff]
    %v78 = vld [vmem:[#allocation5 + $0x108] sm:$0xff]
    %v79 = vld [vmem:[#allocation5 + $0x110] sm:$0xff]
    %v80 = vld [vmem:[#allocation5 + $0x118] sm:$0xff]
    %v81 = vld [vmem:[#allocation5 + $0x120] sm:$0x1]
    %v82 = vperm.slane %v47, 0
    %vm83 = vcmask 130048
    %v85 = vsel %vm83, %v44, 0
    %87 = vmatpush.msra.mxu0 0.0
    %88 = vmatpush.msra.mxu0 0.0
    %89 = vmatpush.msra.mxu0 0.0
    %90 = vmatpush.msra.mxu0 0.0
    %91 = vmatpush.msra.mxu0 0.0
    %92 = vmatpush.msra.mxu0 0.0
    %93 = vmatpush.msra.mxu0 0.0
    %94 = vmatpush.msra.mxu0 0.0
    %95 = vmatpush.msra.mxu0 0.0
    %96 = vmatpush.msra.mxu0 0.0
    %97 = vmatpush.msra.mxu0 0.0
    %98 = vmatpush.msra.mxu0 0.0
    %99 = vmatpush.msra.mxu0 0.0
    %100 = vmatpush.msra.mxu0 0.0
    %101 = vmatpush.msra.mxu0 %v46
    %102 = vmatpush.msra.mxu0 %v45
    %103 = vmatmul.f32.gmra.mxu0 %v85
    %v104 = vpop.f32.mrf.mxu0
    %v105 = vadd.f32 %v82, %v104
    %106 = vdwg.mxu0
    %v107 = vmax.f32 %v105, 0.0
    %v108 = vperm.slane %v64, 0
    %109 = vmatpush.msra.mxu0 %v63
    %110 = vmatpush.msra.mxu0 %v62
    %111 = vmatpush.msra.mxu0 %v61
    %112 = vmatpush.msra.mxu0 %v60
    %113 = vmatpush.msra.mxu0 %v59
    %114 = vmatpush.msra.mxu0 %v58
    %115 = vmatpush.msra.mxu0 %v57
    %116 = vmatpush.msra.mxu0 %v56
    %117 = vmatpush.msra.mxu0 %v55
    %118 = vmatpush.msra.mxu0 %v54
    %119 = vmatpush.msra.mxu0 %v53
    %120 = vmatpush.msra.mxu0 %v52
    %121 = vmatpush.msra.mxu0 %v51
    %122 = vmatpush.msra.mxu0 %v50
    %123 = vmatpush.msra.mxu0 %v49
    %124 = vmatpush.msra.mxu0 %v48
    %125 = vmatmul.f32.gmra.mxu0 %v107
    %v126 = vpop.f32.mrf.mxu0
    %v127 = vadd.f32 %v108, %v126
    %128 = vdwg.mxu0
    %v129 = vmax.f32 %v127, 0.0
    %v130 = vperm.slane %v81, 0
    %131 = vmatpush.msra.mxu0 %v80
    %132 = vmatpush.msra.mxu0 %v79
    %133 = vmatpush.msra.mxu0 %v78
    %134 = vmatpush.msra.mxu0 %v77
    %135 = vmatpush.msra.mxu0 %v76
    %136 = vmatpush.msra.mxu0 %v75
    %137 = vmatpush.msra.mxu0 %v74
    %138 = vmatpush.msra.mxu0 %v73
    %139 = vmatpush.msra.mxu0 %v72
    %140 = vmatpush.msra.mxu0 %v71
    %141 = vmatpush.msra.mxu0 %v70
    %142 = vmatpush.msra.mxu0 %v69
    %143 = vmatpush.msra.mxu0 %v68
    %144 = vmatpush.msra.mxu0 %v67
    %145 = vmatpush.msra.mxu0 %v66
    %146 = vmatpush.msra.mxu0 %v65
    %147 = vmatmul.f32.gmra.mxu0 %v129
    %v148 = vpop.f32.mrf.mxu0
    %v149 = vadd.f32 %v130, %v148
    %150 = vdwg.mxu0
    %151 = vst [vmem:[#allocation7] sm:$0xff] %v149
    %v152 = vlaneseq
    %v153 = vand.u32 %v152, 127
    %vm154 = vcmp.lt.s32.totalorder %v153, 8
    %v155 = vsel %vm154, %v149, -inf
    %156 = vmax.xlane.f32.xlu0 %v155
    %v157 = vpop.xlane.xlu0 %156
    %vm158 = vcmp.ge.f32.partialorder %v155, %v157
    %v159 = vsel %vm158, %v153, 128
    %v160 = vand.u32 %v159, 65535
    %v161 = vshra.s32 %v159, 16
    %v162 = vcvt.s32.f32 %v160
    %v163 = vcvt.s32.f32 %v161
    %164 = vmin.xlane.f32.xlu0 %v163
    %v165 = vpop.xlane.xlu0 %164
    %vm166 = vcmp.eq.f32.partialorder %v163, %v165
    %v167 = vsel %vm166, %v162, inf
    %168 = vmin.xlane.f32.xlu0 %v167
    %v169 = vpop.xlane.xlu0 %168
    %v170 = vcvt.f32.s32 %v169
    %v171 = vcvt.f32.s32 %v165
    %v172 = vshll.u32 %v171, 16
    %v173 = vadd.s32 %v172, %v170
    %vm174 = vcmask 7168
    %175 = vst.msk [vmem:[%s3] sm:$0xff] %vm174, %v173
    // Predicated region
    $region18: #{tpu_custom_call.1} parent=1 // pred_check
      _
    $region19: #{tpu_custom_call.1} parent=1 // pred_check_branch
      %177 = sbr.rel (0) target = $region21
    $region20: #{tpu_custom_call.1} parent=1 // pred_region
      %179 = vsyncadd [#allocation4], 0
      %s181 = sshll.u32 [#allocation7], 4
      %s182 = int_to_ptr.vmem [resolvable:$true] %s181
      %s183 = sshll.u32 %s2, 4
      %s184 = int_to_ptr.hbm [resolvable:$true] %s183
      %186 = dma.vmem_to_hbm [thread:$0]  %s182, 128, %s184, [#allocation4]
    $region21: #{tpu_custom_call.1} parent=1 // pred_fallthru
      _
    // Predicated region
    $region22: #{tpu_custom_call.1} parent=1 // pred_check
      _
    $region23: #{tpu_custom_call.1} parent=1 // pred_check_branch
      %188 = sbr.rel (0) target = $region25
    $region24: #{tpu_custom_call.1} parent=1 // pred_region
      _
    $region25: #{tpu_custom_call.1} parent=1 // pred_fallthru
      _
    // Predicated region
    $region26: #{tpu_custom_call.1} parent=1 // pred_check
      _
    $region27: #{tpu_custom_call.1} parent=1 // pred_check_branch
      %190 = sbr.rel (0) target = $region29
    $region28: #{tpu_custom_call.1} parent=1 // pred_region
      %192 = dma.done [#allocation4], 128
    $region29: #{tpu_custom_call.1} parent=1 // pred_fallthru
      _
    // Predicated region
    $region30: #{tpu_custom_call.1} parent=1 // pred_check
      _
    $region31: #{tpu_custom_call.1} parent=1 // pred_check_branch
      %194 = sbr.rel (0) target = $region33
    $region32: #{tpu_custom_call.1} parent=1 // pred_region
      _
    $region33: #{tpu_custom_call.1} parent=1 // pred_fallthru
      _
    %195 = vsyncpa [#allocation3], 1
    %196 = vsyncpa [#allocation6], 1
    %197 = vsyncpa [#allocation4], 1

</llo_original>
